<compile_context>
chip_gen: v7x
topology: tpu7x:2x2x1
jax: 0.10.0
libtpu: 0.0.40
codegen_flags: <defaults>
</compile_context>

<pallas_src>
from functools import partial

import jax
import jax.numpy as jnp
import numpy as np
from jax.experimental import pallas as pl
from jax.experimental.pallas import tpu as pltpu


def _round_up(x, m):
    return ((x + m - 1) // m) * m


def _num_tensorcores():
    """Best-effort TensorCore count (v7x has 2 per chip); conservative fallback of 1."""
    try:
        info = pltpu.get_tpu_info()
    except Exception:
        return 1
    for attr in ("num_tensorcores", "num_cores", "tensor_core_count", "core_count"):
        v = getattr(info, attr, None)
        if isinstance(v, int) and v > 0:
            return v
    return 1


def _pick_batch_tile(B, C, L, K, F_pad, num_tc):
    """Batch tile targeting ~1024 matmul rows/step under a conservative VMEM budget."""
    rows_target = 1024

    def vmem_bytes(tb):
        m = tb * L
        x_tile = tb * C * L * 4                   # f32 input block
        x_work = 2 * m * C * 4 + m * C * 2        # transposed f32 + rolled f32 + bf16 tap
        acc = 2 * m * F_pad * 4                   # accumulator + post-ReLU copy
        out = tb * F_pad * 4
        w = K * C * F_pad * 2 + F_pad * 4
        return 2 * (x_tile + out + w) + x_work + acc   # in/out/weight double-buffered

    tb = max(1, min(B, rows_target // max(L, 1)))
    while tb > 1 and vmem_bytes(tb) > 12 * 1024 * 1024:
        tb = max(1, tb // 2)

    # Split across >=2 grid steps only when the chip has >=2 TCs (megacore sharding can
    # pay off) AND each step keeps >= 256 matmul rows; otherwise the split is a purely
    # serial loop plus per-step overhead.
    if num_tc >= 2:
        tb_split = pl.cdiv(B, num_tc)
        if tb_split < tb and tb_split * L >= 256:
            tb = tb_split

    # Sublane-friendly output blocks (multiple of 8 rows) when the batch allows it.
    if B >= 8 and tb >= 8:
        tb = (tb // 8) * 8
    return tb


def _textual_cnn_kernel(x_ref, w_ref, b_ref, o_ref, *, K, L, L_out, TB):
    # x_ref: (TB, C, L) f32   w_ref: (K*C, F_pad) bf16   b_ref: (1, F_pad) f32
    # o_ref: (TB, F_pad) f32
    C = x_ref.shape[1]
    F_pad = w_ref.shape[-1]
    M = TB * L

    # On-chip (C, L) -> (L, C) swap (XLU) + flatten batch/time into the matmul M axis.
    x2d = jnp.swapaxes(x_ref[...], 1, 2).reshape(M, C)            # (M, C) f32

    # K accumulating MXU matmuls, one per conv tap. Tap k's rows are x[(m + k) % M, :]
    # (pltpu.roll follows jnp.roll semantics: shift = -k mod M, kept positive). Only the
    # (M, C) tap being consumed is cast to bf16; no (M, K*C) im2col is materialized.
    acc = jnp.dot(x2d.astype(jnp.bfloat16), w_ref[pl.ds(0, C), :],
                  preferred_element_type=jnp.float32)             # (M, F_pad) f32
    for k in range(1, K):
        xk = pltpu.roll(x2d, shift=M - k, axis=0)
        acc = acc + jnp.dot(xk.astype(jnp.bfloat16), w_ref[pl.ds(k * C, C), :],
                            preferred_element_type=jnp.float32)

    feat = jnp.maximum(acc + b_ref[...], 0.0)                     # bias + ReLU (f32)

    # Per-sequence max over valid time positions t < L_out; wrapped / cross-sequence
    # rows (t >= L_out) are zeroed, which is neutral because ReLU output >= 0.
    feat = feat.reshape(TB, L, F_pad)
    t_idx = jax.lax.broadcasted_iota(jnp.int32, (1, L, F_pad), 1)  # broadcast mask
    feat = jnp.where(t_idx < L_out, feat, 0.0)
    o_ref[...] = jnp.max(feat, axis=1)                             # (TB, F_pad) lane-dense


def textual_cnn_forward(x_ncl, weight_oik, bias, pooling_type='filter-wise'):
    """x_ncl: (B, C_in, L), weight_oik: (n_filters, C_in, K), bias: (n_filters,)."""
    assert pooling_type in ('filter-wise', 'overall')
    B, C, L = x_ncl.shape
    Fn, Ci, K = weight_oik.shape
    assert Ci == C and L >= K

    L_out = L - K + 1
    F_pad = _round_up(Fn, 128)                 # lane-dense output slab

    TB = _pick_batch_tile(B, C, L, K, F_pad, _num_tensorcores())
    B_pad = _round_up(B, TB)

    # x stays in its native (B, C, L) f32 layout; transpose + bf16 cast happen in-kernel.
    x = x_ncl.astype(jnp.float32)
    if B_pad != B:
        x = jnp.pad(x, ((0, B_pad - B), (0, 0), (0, 0)))

    # Weight: (F, C, K) -> (K, C, F) -> (K*C, F) so tap k's slice is rows [k*C, (k+1)*C);
    # pad F to the lane-dense width and cast to bf16 for the MXU.
    w = jnp.transpose(weight_oik, (2, 1, 0)).reshape(K * C, Fn)
    w = jnp.pad(w, ((0, 0), (0, F_pad - Fn))).astype(jnp.bfloat16)      # (K*C, F_pad)
    b2 = jnp.pad(bias.astype(jnp.float32), (0, F_pad - Fn)).reshape(1, F_pad)

    kernel = partial(_textual_cnn_kernel, K=K, L=L, L_out=L_out, TB=TB)

    out = pl.pallas_call(
        kernel,
        out_shape=jax.ShapeDtypeStruct((B_pad, F_pad), jnp.float32),
        grid_spec=pltpu.PrefetchScalarGridSpec(
            num_scalar_prefetch=0,
            grid=(B_pad // TB,),
            in_specs=[
                pl.BlockSpec((TB, C, L), lambda i: (i, 0, 0)),      # x batch tile (native)
                pl.BlockSpec((K * C, F_pad), lambda i: (0, 0)),     # flattened weight
                pl.BlockSpec((1, F_pad), lambda i: (0, 0)),         # bias
            ],
            out_specs=pl.BlockSpec((TB, F_pad), lambda i: (i, 0)),
        ),
        compiler_params=pltpu.CompilerParams(
            dimension_semantics=("parallel",),
            vmem_limit_bytes=32 * 1024 * 1024,   # safe on v5e/v6e/v7x; tiles budgeted <=12 MiB
        ),
    )(x, w, b2)

    out = out[:B, :Fn]                   # drop batch / filter padding
    if pooling_type == 'overall':
        # max over the flattened (1, F*L_out) view == max over F of the filter-wise maxima
        out = jnp.max(out, axis=1, keepdims=True)
    return out


def _reference(x_ncl, weight_oik, bias, pooling_type):
    # Pure-JAX reference matching torch semantics (NCL conv, VALID, stride 1), with the
    # same bf16 input/weight rounding the kernel applies (accumulation stays f32).
    xq = x_ncl.astype(jnp.bfloat16).astype(jnp.float32)
    wq = weight_oik.astype(jnp.bfloat16).astype(jnp.float32)
    logits = jax.lax.conv_general_dilated(
        xq, wq, window_strides=(1,), padding='VALID',
        dimension_numbers=('NCH', 'OIH', 'NCH'),
        precision=jax.lax.Precision.HIGHEST,
    ) + bias[None, :, None]
    feat = jax.nn.relu(logits)                       # (B, F, L_out)
    if pooling_type == 'overall':
        feat = feat.reshape(x_ncl.shape[0], 1, -1)
    pool = jnp.max(feat, axis=-1)                    # max_pool1d over full width
    return pool.reshape(x_ncl.shape[0], -1)


if __name__ == "__main__":
    # Small shapes consistent with the module: batch=2, embed_dim=32, seq=16,
    # n_filters=64, filter_size=5  (L_out = 12).
    B, C, L = 2, 32, 16
    Fn, K = 64, 5

    key = jax.random.PRNGKey(0)
    kx, kw, kb = jax.random.split(key, 3)

    x = jax.random.normal(kx, (B, C, L), dtype=jnp.float32)
    bound = 1.0 / np.sqrt(C * K)                      # kaiming-uniform-ish, deterministic
    weight = jax.random.uniform(kw, (Fn, C, K), minval=-bound, maxval=bound,
                                dtype=jnp.float32)
    bias = jax.random.uniform(kb, (Fn,), minval=-bound, maxval=bound,
                              dtype=jnp.float32)

    # filter-wise pooling (module default)
    out_fw = jax.block_until_ready(textual_cnn_forward(x, weight, bias, 'filter-wise'))
    ref_fw = _reference(x, weight, bias, 'filter-wise')
    np.testing.assert_allclose(np.asarray(out_fw), np.asarray(ref_fw),
                               rtol=1e-4, atol=1e-4)

    # overall pooling
    out_ov = jax.block_until_ready(textual_cnn_forward(x, weight, bias, 'overall'))
    ref_ov = _reference(x, weight, bias, 'overall')
    np.testing.assert_allclose(np.asarray(out_ov), np.asarray(ref_ov),
                               rtol=1e-4, atol=1e-4)

    print("KERNEL_OK")
</pallas_src>

<mosaic_0001>
module attributes {stable_mosaic.version = 11 : i64} {
  func.func @_textual_cnn_kernel(%arg0: i32, %arg1: memref<2x32x16xf32, #tpu.memory_space<vmem>>, %arg2: memref<160x128xbf16, #tpu.memory_space<vmem>>, %arg3: memref<1x128xf32, #tpu.memory_space<vmem>>, %arg4: memref<2x128xf32, #tpu.memory_space<vmem>>) attributes {dimension_semantics = [#tpu.dimension_semantics<parallel>], iteration_bounds = array<i64: 1>, scalar_prefetch = 0 : i64, scratch_operands = 0 : i64, tpu.core_type = #tpu.core_type<tc>, window_params = [{transform_indices = @transform_0, window_bounds = array<i64: 2, 32, 16>}, {pipeline_mode = #tpu.pipeline_mode<synchronous>, transform_indices = @transform_1, window_bounds = array<i64: 160, 128>}, {pipeline_mode = #tpu.pipeline_mode<synchronous>, transform_indices = @transform_2, window_bounds = array<i64: 1, 128>}, {transform_indices = @transform_3, window_bounds = array<i64: 2, 128>}]} {
    %c0 = arith.constant 0 : index
    %c0_0 = arith.constant 0 : index
    %c0_1 = arith.constant 0 : index
    %0 = vector.load %arg1[%c0, %c0_0, %c0_1] : memref<2x32x16xf32, #tpu.memory_space<vmem>>, vector<2x32x16xf32>
    %1 = tpu.transpose %0, [0, 2, 1] : vector<2x32x16xf32> -> vector<2x16x32xf32>
    %2 = vector.shape_cast %1 : vector<2x16x32xf32> to vector<32x32xf32>
    %3 = arith.truncf %2 : vector<32x32xf32> to vector<32x32xbf16>
    %c0_2 = arith.constant 0 : index
    %c0_3 = arith.constant 0 : index
    %4 = vector.load %arg2[%c0_2, %c0_3] : memref<160x128xbf16, #tpu.memory_space<vmem>>, vector<32x128xbf16>
    %cst = arith.constant dense<0.000000e+00> : vector<32x128xf32>
    %5 = tpu.matmul %3, %4, %cst {dimension_numbers = #tpu.dot_dimension_numbers<[1], [0], [0], [1], [0, 0, 1, 1], [], []>} : vector<32x32xbf16>, vector<32x128xbf16>, vector<32x128xf32> -> vector<32x128xf32>
    %c31_i32 = arith.constant 31 : i32
    %6 = tpu.dynamic_rotate %2 by %c31_i32 dim 0 : vector<32x32xf32>, i32 -> vector<32x32xf32>
    %7 = arith.truncf %6 : vector<32x32xf32> to vector<32x32xbf16>
    %c32 = arith.constant 32 : index
    %c0_4 = arith.constant 0 : index
    %8 = vector.load %arg2[%c32, %c0_4] : memref<160x128xbf16, #tpu.memory_space<vmem>>, vector<32x128xbf16>
    %cst_5 = arith.constant dense<0.000000e+00> : vector<32x128xf32>
    %9 = tpu.matmul %7, %8, %cst_5 {dimension_numbers = #tpu.dot_dimension_numbers<[1], [0], [0], [1], [0, 0, 1, 1], [], []>} : vector<32x32xbf16>, vector<32x128xbf16>, vector<32x128xf32> -> vector<32x128xf32>
    %10 = arith.addf %5, %9 : vector<32x128xf32>
    %c30_i32 = arith.constant 30 : i32
    %11 = tpu.dynamic_rotate %2 by %c30_i32 dim 0 : vector<32x32xf32>, i32 -> vector<32x32xf32>
    %12 = arith.truncf %11 : vector<32x32xf32> to vector<32x32xbf16>
    %c64 = arith.constant 64 : index
    %c0_6 = arith.constant 0 : index
    %13 = vector.load %arg2[%c64, %c0_6] : memref<160x128xbf16, #tpu.memory_space<vmem>>, vector<32x128xbf16>
    %cst_7 = arith.constant dense<0.000000e+00> : vector<32x128xf32>
    %14 = tpu.matmul %12, %13, %cst_7 {dimension_numbers = #tpu.dot_dimension_numbers<[1], [0], [0], [1], [0, 0, 1, 1], [], []>} : vector<32x32xbf16>, vector<32x128xbf16>, vector<32x128xf32> -> vector<32x128xf32>
    %15 = arith.addf %10, %14 : vector<32x128xf32>
    %c29_i32 = arith.constant 29 : i32
    %16 = tpu.dynamic_rotate %2 by %c29_i32 dim 0 : vector<32x32xf32>, i32 -> vector<32x32xf32>
    %17 = arith.truncf %16 : vector<32x32xf32> to vector<32x32xbf16>
    %c96 = arith.constant 96 : index
    %c0_8 = arith.constant 0 : index
    %18 = vector.load %arg2[%c96, %c0_8] : memref<160x128xbf16, #tpu.memory_space<vmem>>, vector<32x128xbf16>
    %cst_9 = arith.constant dense<0.000000e+00> : vector<32x128xf32>
    %19 = tpu.matmul %17, %18, %cst_9 {dimension_numbers = #tpu.dot_dimension_numbers<[1], [0], [0], [1], [0, 0, 1, 1], [], []>} : vector<32x32xbf16>, vector<32x128xbf16>, vector<32x128xf32> -> vector<32x128xf32>
    %20 = arith.addf %15, %19 : vector<32x128xf32>
    %c28_i32 = arith.constant 28 : i32
    %21 = tpu.dynamic_rotate %2 by %c28_i32 dim 0 : vector<32x32xf32>, i32 -> vector<32x32xf32>
    %22 = arith.truncf %21 : vector<32x32xf32> to vector<32x32xbf16>
    %c128 = arith.constant 128 : index
    %c0_10 = arith.constant 0 : index
    %23 = vector.load %arg2[%c128, %c0_10] : memref<160x128xbf16, #tpu.memory_space<vmem>>, vector<32x128xbf16>
    %cst_11 = arith.constant dense<0.000000e+00> : vector<32x128xf32>
    %24 = tpu.matmul %22, %23, %cst_11 {dimension_numbers = #tpu.dot_dimension_numbers<[1], [0], [0], [1], [0, 0, 1, 1], [], []>} : vector<32x32xbf16>, vector<32x128xbf16>, vector<32x128xf32> -> vector<32x128xf32>
    %25 = arith.addf %20, %24 : vector<32x128xf32>
    %c0_12 = arith.constant 0 : index
    %c0_13 = arith.constant 0 : index
    %26 = vector.load %arg3[%c0_12, %c0_13] : memref<1x128xf32, #tpu.memory_space<vmem>>, vector<1x128xf32>
    %27 = vector.broadcast %26 : vector<1x128xf32> to vector<32x128xf32>
    %28 = arith.addf %25, %27 : vector<32x128xf32>
    %cst_14 = arith.constant 0.000000e+00 : f32
    %29 = vector.broadcast %cst_14 : f32 to vector<32x128xf32>
    %30 = arith.maximumf %28, %29 : vector<32x128xf32>
    %31 = vector.shape_cast %30 : vector<32x128xf32> to vector<2x16x128xf32>
    %32 = tpu.iota {dimensions = array<i32: 1>} : vector<1x16x128xi32>
    %c12_i32 = arith.constant 12 : i32
    %33 = vector.broadcast %c12_i32 : i32 to vector<1x16x128xi32>
    %34 = arith.cmpi slt, %32, %33 : vector<1x16x128xi32>
    %cst_15 = arith.constant 0.000000e+00 : f32
    %35 = vector.shape_cast %34 : vector<1x16x128xi1> to vector<1x16x128xi1>
    %36 = vector.broadcast %35 : vector<1x16x128xi1> to vector<2x16x128xi1>
    %37 = vector.broadcast %cst_15 : f32 to vector<2x16x128xf32>
    %38 = arith.select %36, %31, %37 : vector<2x16x128xi1>, vector<2x16x128xf32>
    %cst_16 = arith.constant dense<0xFF800000> : vector<2x128xf32>
    %39 = vector.multi_reduction <maximumf>, %38, %cst_16 [1] : vector<2x16x128xf32> to vector<2x128xf32>
    %c0_17 = arith.constant 0 : index
    %c0_18 = arith.constant 0 : index
    %40 = vector.load %arg4[%c0_17, %c0_18] : memref<2x128xf32, #tpu.memory_space<vmem>>, vector<2x128xf32>
    tpu.vector_store %arg4[%c0_17, %c0_18], %39 {strides = array<i32>} : memref<2x128xf32, #tpu.memory_space<vmem>>, vector<2x128xf32>,
    return
  }
  func.func @transform_0(%arg0: i32) -> (i32, i32, i32) {
    %c0_i32 = arith.constant 0 : i32
    %c0_i32_0 = arith.constant 0 : i32
    %c0_i32_1 = arith.constant 0 : i32
    return %arg0, %c0_i32, %c0_i32_0 : i32, i32, i32
  }
  func.func @transform_1(%arg0: i32) -> (i32, i32) {
    %c0_i32 = arith.constant 0 : i32
    %c0_i32_0 = arith.constant 0 : i32
    %c0_i32_1 = arith.constant 0 : i32
    return %c0_i32, %c0_i32_0 : i32, i32
  }
  func.func @transform_2(%arg0: i32) -> (i32, i32) {
    %c0_i32 = arith.constant 0 : i32
    %c0_i32_0 = arith.constant 0 : i32
    %c0_i32_1 = arith.constant 0 : i32
    return %c0_i32, %c0_i32_0 : i32, i32
  }
  func.func @transform_3(%arg0: i32) -> (i32, i32) {
    %c0_i32 = arith.constant 0 : i32
    %c0_i32_0 = arith.constant 0 : i32
    return %arg0, %c0_i32 : i32, i32
  }
}

</mosaic_0001>

<llo_original>
// kernel: tpu_custom_call.1
$region0: #{tpu_custom_call.1}
  #allocation0 [shape = 'u32[]', space=smem, size = 0x4, offset = 0x4, fixed_abs, tag = 'smem constant byte address 0x4 - core index']
  #allocation1 [shape = 'u32[144,128]{1,0:T(1,128)}', space=vmem, size = 0x12000, scoped, tag = 'internal scratch']
  %s0 = inlined_call_operand.vmem [shape: f32[2,32,16], index: 0, kind: input, shape index: {}]
  %s1 = inlined_call_operand.vmem [shape: bf16[160,128], index: 1, kind: input, shape index: {}]
  %s2 = inlined_call_operand.vmem [shape: f32[1,128], index: 2, kind: input, shape index: {}]
  %s3 = inlined_call_operand.hbm [shape: f32[2,128], index: 3, kind: output, shape index: {}]
  %s4 = sld [smem:[#allocation0]]
  $region22: #{tpu_custom_call.1} parent=0
    _
  %s6 = ssub.s32 1, %s4
  %s7 = scalar_select 0, %s6, %s4
  $region1: #{tpu_custom_call.1} parent=0
    #allocation2 [shape = 'u8[1024]{0}', space=vmem, size = 0x400, scoped, tag = 'output window, operand 0, single buffered']
    #allocation3 [shape = 's32[1]{0}', space=sflag, size = 0x4, scoped, tag = 'scoped memory for tpu_custom_call.1']
    %8 = vsyncpa [#allocation3], 0
    // Predicated region
    $region2: #{tpu_custom_call.1} parent=1 // pred_check
      _
    $region3: #{tpu_custom_call.1} parent=1 // pred_check_branch
      %10 = sbr.rel (0) target = $region5
    $region4: #{tpu_custom_call.1} parent=1 // pred_region
      _
    $region5: #{tpu_custom_call.1} parent=1 // pred_fallthru
      _
    // Predicated region
    $region6: #{tpu_custom_call.1} parent=1 // pred_check
      _
    $region7: #{tpu_custom_call.1} parent=1 // pred_check_branch
      %12 = sbr.rel (0) target = $region9
    $region8: #{tpu_custom_call.1} parent=1 // pred_region
      _
    $region9: #{tpu_custom_call.1} parent=1 // pred_fallthru
      _
    // Predicated region
    $region10: #{tpu_custom_call.1} parent=1 // pred_check
      _
    $region11: #{tpu_custom_call.1} parent=1 // pred_check_branch
      %14 = sbr.rel (0) target = $region13
    $region12: #{tpu_custom_call.1} parent=1 // pred_region
      _
    $region13: #{tpu_custom_call.1} parent=1 // pred_fallthru
      _
    %v16 = vld [vmem:[%s0] sm:$0xff]
    %v17 = vld [vmem:[%s0 + $0x8] sm:$0xff]
    %v18 = vld [vmem:[%s0 + $0x10] sm:$0xff]
    %v19 = vld [vmem:[%s0 + $0x18] sm:$0xff]
    %v20 = vld [vmem:[%s0 + $0x20] sm:$0xff]
    %v21 = vld [vmem:[%s0 + $0x28] sm:$0xff]
    %v22 = vld [vmem:[%s0 + $0x30] sm:$0xff]
    %v23 = vld [vmem:[%s0 + $0x38] sm:$0xff]
    %24 = vxpose.xlu0.b32.start [1/16] %v16, 128
    %25 = vxpose.xlu0.b32.cont [2/16] %v17, 128
    %26 = vxpose.xlu0.b32.cont [3/16] %v18, 128
    %27 = vxpose.xlu0.b32.cont [4/16] %v19, 128
    %28 = vxpose.xlu0.b32.cont [5/16] 0.0, 128
    %29 = vxpose.xlu0.b32.cont [6/16] 0.0, 128
    %30 = vxpose.xlu0.b32.cont [7/16] 0.0, 128
    %31 = vxpose.xlu0.b32.cont [8/16] 0.0, 128
    %32 = vxpose.xlu0.b32.cont [9/16] 0.0, 128
    %33 = vxpose.xlu0.b32.cont [10/16] 0.0, 128
    %34 = vxpose.xlu0.b32.cont [11/16] 0.0, 128
    %35 = vxpose.xlu0.b32.cont [12/16] 0.0, 128
    %36 = vxpose.xlu0.b32.cont [13/16] 0.0, 128
    %37 = vxpose.xlu0.b32.cont [14/16] 0.0, 128
    %38 = vxpose.xlu0.b32.cont [15/16] 0.0, 128
    %39 = vxpose.xlu0.b32.end [16/16] 0.0, 128
    %v40 = vpop.trf.xlu0
    %v41 = vpop.trf.xlu0
    %v42 = vpop.trf.xlu0
    %v43 = vpop.trf.xlu0
    %v44 = vpop.trf.xlu0
    %v45 = vpop.trf.xlu0
    %v46 = vpop.trf.xlu0
    %v47 = vpop.trf.xlu0
    %v48 = vpop.trf.xlu0
    %v49 = vpop.trf.xlu0
    %v50 = vpop.trf.xlu0
    %v51 = vpop.trf.xlu0
    %v52 = vpop.trf.xlu0
    %v53 = vpop.trf.xlu0
    %v54 = vpop.trf.xlu0
    %v55 = vpop.trf.xlu0
    %56 = vxpose.xlu0.b32.start [1/16] %v20, 128
    %57 = vxpose.xlu0.b32.cont [2/16] %v21, 128
    %58 = vxpose.xlu0.b32.cont [3/16] %v22, 128
    %59 = vxpose.xlu0.b32.cont [4/16] %v23, 128
    %60 = vxpose.xlu0.b32.cont [5/16] 0.0, 128
    %61 = vxpose.xlu0.b32.cont [6/16] 0.0, 128
    %62 = vxpose.xlu0.b32.cont [7/16] 0.0, 128
    %63 = vxpose.xlu0.b32.cont [8/16] 0.0, 128
    %64 = vxpose.xlu0.b32.cont [9/16] 0.0, 128
    %65 = vxpose.xlu0.b32.cont [10/16] 0.0, 128
    %66 = vxpose.xlu0.b32.cont [11/16] 0.0, 128
    %67 = vxpose.xlu0.b32.cont [12/16] 0.0, 128
    %68 = vxpose.xlu0.b32.cont [13/16] 0.0, 128
    %69 = vxpose.xlu0.b32.cont [14/16] 0.0, 128
    %70 = vxpose.xlu0.b32.cont [15/16] 0.0, 128
    %71 = vxpose.xlu0.b32.end [16/16] 0.0, 128
    %v72 = vpop.trf.xlu0
    %v73 = vpop.trf.xlu0
    %v74 = vpop.trf.xlu0
    %v75 = vpop.trf.xlu0
    %v76 = vpop.trf.xlu0
    %v77 = vpop.trf.xlu0
    %v78 = vpop.trf.xlu0
    %v79 = vpop.trf.xlu0
    %v80 = vpop.trf.xlu0
    %v81 = vpop.trf.xlu0
    %v82 = vpop.trf.xlu0
    %v83 = vpop.trf.xlu0
    %v84 = vpop.trf.xlu0
    %v85 = vpop.trf.xlu0
    %v86 = vpop.trf.xlu0
    %v87 = vpop.trf.xlu0
    %v88 = vpack.c.bf16 %v41, %v40
    %v89 = vpack.c.bf16 %v73, %v72
    %v90 = vld [vmem:[%s1] sm:$0xf]
    %v91 = vld [vmem:[%s1 + $0x4] sm:$0xf]
    %v92 = vld [vmem:[%s1 + $0x8] sm:$0xf]
    %v93 = vld [vmem:[%s1 + $0xc] sm:$0xf]
    %v94 = vrot.slane %v40, 1
    %v95 = vrot.slane %v41, 1
    %v96 = vrot.slane %v72, 1
    %v97 = vrot.slane %v73, 1
    %v98 = vlaneseq
    %v99 = vshrl.u32 %v98, 7
    %vm100 = vcmp.lt.s32.totalorder %v99, 7
    %v101 = vsel %vm100, %v96, %v97
    %v102 = vsel %vm100, %v95, %v96
    %v103 = vsel %vm100, %v94, %v95
    %v104 = vsel %vm100, %v97, %v94
    %v105 = vpack.c.bf16 %v102, %v103
    %v106 = vpack.c.bf16 %v104, %v101
    %v107 = vld [vmem:[%s1 + $0x10] sm:$0xf]
    %v108 = vld [vmem:[%s1 + $0x14] sm:$0xf]
    %v109 = vld [vmem:[%s1 + $0x18] sm:$0xf]
    %v110 = vld [vmem:[%s1 + $0x1c] sm:$0xf]
    %v115 = vunpack.c.l.b16 %v107
    %v116 = vunpack.c.l.b16 %v108
    %v117 = vunpack.c.l.b16 %v109
    %v118 = vunpack.c.l.b16 %v110
    %v119 = vpack.c.b16 %v116, %v115
    %v120 = vpack.c.b16 %v118, %v117
    %vm123 = vcmask 261120
    %v125 = vsel %vm123, %v105, 0
    %v128 = vsel %vm123, %v106, 0
    %130 = vmatprep.subr.bf16.mxu0 0
    %131 = vmatpush1.bf16.msra.mxu0 %v119
    %132 = vmatprep.subr.bf16.mxu0 0
    %133 = vmatpush1.bf16.msra.mxu0 %v120
    %134 = vmatprep.subr.bf16.mxu0 0
    %135 = vmatpush1.bf16.msra.mxu0 0
    %136 = vmatprep.subr.bf16.mxu0 0
    %137 = vmatpush1.bf16.msra.mxu0 0
    %138 = vmatprep.subr.bf16.mxu0 0
    %139 = vmatpush1.bf16.msra.mxu0 0
    %140 = vmatprep.subr.bf16.mxu0 0
    %141 = vmatpush1.bf16.msra.mxu0 0
    %142 = vmatprep.subr.bf16.mxu0 0
    %143 = vmatpush1.bf16.msra.mxu0 0
    %144 = vmatprep.subr.bf16.mxu0 0
    %145 = vmatpush1.bf16.msra.mxu0 0
    %146 = vmatprep.subr.bf16.mxu0 0
    %147 = vmatpush1.bf16.msra.mxu0 0
    %148 = vmatprep.subr.bf16.mxu0 0
    %149 = vmatpush1.bf16.msra.mxu0 0
    %150 = vmatprep.subr.bf16.mxu0 0
    %151 = vmatpush1.bf16.msra.mxu0 0
    %152 = vmatprep.subr.bf16.mxu0 0
    %153 = vmatpush1.bf16.msra.mxu0 0
    %154 = vmatprep.subr.bf16.mxu0 0
    %155 = vmatpush1.bf16.msra.mxu0 0
    %156 = vmatprep.subr.bf16.mxu0 0
    %157 = vmatpush1.bf16.msra.mxu0 0
    %158 = vmatprep.subr.bf16.mxu0 0
    %159 = vmatpush1.bf16.msra.mxu0 0
    %160 = vmatprep.subr.bf16.mxu0 0
    %161 = vmatpush1.bf16.msra.mxu0 0
    %162 = vmatprep.mubr.bf16.mxu0 0
    %163 = vmatmul.mubr.bf16.gmra.mrb[0].mxu0 %v125
    %v164 = vpop.f32.mrb[0].mxu0
    %v165 = vadd.f32 0.0, %v164
    %v166 = vpop.f32.mrb[0].mxu0
    %v167 = vpop.f32.mrb[0].mxu0
    %v168 = vadd.f32 0.0, %v167
    %v169 = vpop.f32.mrb[0].mxu0
    %170 = vmatprep.mubr.bf16.mxu0 0
    %171 = vmatmul.mubr.bf16.gmra.mrb[0].mxu0 %v128
    %v172 = vpop.f32.mrb[0].mxu0
    %v173 = vadd.f32 0.0, %v172
    %v174 = vpop.f32.mrb[0].mxu0
    %v175 = vpop.f32.mrb[0].mxu0
    %v176 = vadd.f32 0.0, %v175
    %v177 = vpop.f32.mrb[0].mxu0
    %178 = vdwg.mxu0
    %v183 = vunpack.c.l.b16 %v90
    %v184 = vunpack.c.l.b16 %v91
    %v185 = vunpack.c.l.b16 %v92
    %v186 = vunpack.c.l.b16 %v93
    %v187 = vpack.c.b16 %v184, %v183
    %v188 = vpack.c.b16 %v186, %v185
    %v192 = vsel %vm123, %v88, 0
    %v195 = vsel %vm123, %v89, 0
    %197 = vmatprep.subr.bf16.mxu0 0
    %198 = vmatpush1.bf16.msra.mxu0 %v187
    %199 = vmatprep.subr.bf16.mxu0 0
    %200 = vmatpush1.bf16.msra.mxu0 %v188
    %201 = vmatprep.subr.bf16.mxu0 0
    %202 = vmatpush1.bf16.msra.mxu0 0
    %203 = vmatprep.subr.bf16.mxu0 0
    %204 = vmatpush1.bf16.msra.mxu0 0
    %205 = vmatprep.subr.bf16.mxu0 0
    %206 = vmatpush1.bf16.msra.mxu0 0
    %207 = vmatprep.subr.bf16.mxu0 0
    %208 = vmatpush1.bf16.msra.mxu0 0
    %209 = vmatprep.subr.bf16.mxu0 0
    %210 = vmatpush1.bf16.msra.mxu0 0
    %211 = vmatprep.subr.bf16.mxu0 0
    %212 = vmatpush1.bf16.msra.mxu0 0
    %213 = vmatprep.subr.bf16.mxu0 0
    %214 = vmatpush1.bf16.msra.mxu0 0
    %215 = vmatprep.subr.bf16.mxu0 0
    %216 = vmatpush1.bf16.msra.mxu0 0
    %217 = vmatprep.subr.bf16.mxu0 0
    %218 = vmatpush1.bf16.msra.mxu0 0
    %219 = vmatprep.subr.bf16.mxu0 0
    %220 = vmatpush1.bf16.msra.mxu0 0
    %221 = vmatprep.subr.bf16.mxu0 0
    %222 = vmatpush1.bf16.msra.mxu0 0
    %223 = vmatprep.subr.bf16.mxu0 0
    %224 = vmatpush1.bf16.msra.mxu0 0
    %225 = vmatprep.subr.bf16.mxu0 0
    %226 = vmatpush1.bf16.msra.mxu0 0
    %227 = vmatprep.subr.bf16.mxu0 0
    %228 = vmatpush1.bf16.msra.mxu0 0
    %229 = vmatprep.mubr.bf16.mxu0 0
    %230 = vmatmul.mubr.bf16.gmra.mrb[0].mxu0 %v192
    %v231 = vpop.f32.mrb[0].mxu0
    %v232 = vadd.f32 %v165, %v231
    %v233 = vpop.f32.mrb[0].mxu0
    %v234 = vpop.f32.mrb[0].mxu0
    %v235 = vadd.f32 %v168, %v234
    %v236 = vpop.f32.mrb[0].mxu0
    %237 = vmatprep.mubr.bf16.mxu0 0
    %238 = vmatmul.mubr.bf16.gmra.mrb[0].mxu0 %v195
    %v239 = vpop.f32.mrb[0].mxu0
    %v240 = vadd.f32 %v173, %v239
    %v241 = vpop.f32.mrb[0].mxu0
    %v242 = vpop.f32.mrb[0].mxu0
    %v243 = vadd.f32 %v176, %v242
    %v244 = vpop.f32.mrb[0].mxu0
    %245 = vdwg.mxu0
    %v246 = vrot.slane %v40, 2
    %v247 = vrot.slane %v41, 2
    %v248 = vrot.slane %v72, 2
    %v249 = vrot.slane %v73, 2
    %vm250 = vcmp.lt.s32.totalorder %v99, 6
    %v251 = vsel %vm250, %v248, %v249
    %v252 = vsel %vm250, %v247, %v248
    %v253 = vsel %vm250, %v246, %v247
    %v254 = vsel %vm250, %v249, %v246
    %v255 = vpack.c.bf16 %v252, %v253
    %v256 = vpack.c.bf16 %v254, %v251
    %v257 = vld [vmem:[%s1 + $0x20] sm:$0xf]
    %v258 = vld [vmem:[%s1 + $0x24] sm:$0xf]
    %v259 = vld [vmem:[%s1 + $0x28] sm:$0xf]
    %v260 = vld [vmem:[%s1 + $0x2c] sm:$0xf]
    %v265 = vunpack.c.l.b16 %v257
    %v266 = vunpack.c.l.b16 %v258
    %v267 = vunpack.c.l.b16 %v259
    %v268 = vunpack.c.l.b16 %v260
    %v269 = vpack.c.b16 %v266, %v265
    %v270 = vpack.c.b16 %v268, %v267
    %v274 = vsel %vm123, %v255, 0
    %v277 = vsel %vm123, %v256, 0
    %279 = vmatprep.subr.bf16.mxu0 0
    %280 = vmatpush1.bf16.msra.mxu0 %v269
    %281 = vmatprep.subr.bf16.mxu0 0
    %282 = vmatpush1.bf16.msra.mxu0 %v270
    %283 = vmatprep.subr.bf16.mxu0 0
    %284 = vmatpush1.bf16.msra.mxu0 0
    %285 = vmatprep.subr.bf16.mxu0 0
    %286 = vmatpush1.bf16.msra.mxu0 0
    %287 = vmatprep.subr.bf16.mxu0 0
    %288 = vmatpush1.bf16.msra.mxu0 0
    %289 = vmatprep.subr.bf16.mxu0 0
    %290 = vmatpush1.bf16.msra.mxu0 0
    %291 = vmatprep.subr.bf16.mxu0 0
    %292 = vmatpush1.bf16.msra.mxu0 0
    %293 = vmatprep.subr.bf16.mxu0 0
    %294 = vmatpush1.bf16.msra.mxu0 0
    %295 = vmatprep.subr.bf16.mxu0 0
    %296 = vmatpush1.bf16.msra.mxu0 0
    %297 = vmatprep.subr.bf16.mxu0 0
    %298 = vmatpush1.bf16.msra.mxu0 0
    %299 = vmatprep.subr.bf16.mxu0 0
    %300 = vmatpush1.bf16.msra.mxu0 0
    %301 = vmatprep.subr.bf16.mxu0 0
    %302 = vmatpush1.bf16.msra.mxu0 0
    %303 = vmatprep.subr.bf16.mxu0 0
    %304 = vmatpush1.bf16.msra.mxu0 0
    %305 = vmatprep.subr.bf16.mxu0 0
    %306 = vmatpush1.bf16.msra.mxu0 0
    %307 = vmatprep.subr.bf16.mxu0 0
    %308 = vmatpush1.bf16.msra.mxu0 0
    %309 = vmatprep.subr.bf16.mxu0 0
    %310 = vmatpush1.bf16.msra.mxu0 0
    %311 = vmatprep.mubr.bf16.mxu0 0
    %312 = vmatmul.mubr.bf16.gmra.mrb[0].mxu0 %v274
    %v313 = vpop.f32.mrb[0].mxu0
    %v314 = vadd.f32 0.0, %v313
    %v315 = vpop.f32.mrb[0].mxu0
    %v316 = vpop.f32.mrb[0].mxu0
    %v317 = vadd.f32 0.0, %v316
    %v318 = vpop.f32.mrb[0].mxu0
    %319 = vmatprep.mubr.bf16.mxu0 0
    %320 = vmatmul.mubr.bf16.gmra.mrb[0].mxu0 %v277
    %v321 = vpop.f32.mrb[0].mxu0
    %v322 = vadd.f32 0.0, %v321
    %v323 = vpop.f32.mrb[0].mxu0
    %v324 = vpop.f32.mrb[0].mxu0
    %v325 = vadd.f32 0.0, %v324
    %v326 = vpop.f32.mrb[0].mxu0
    %327 = vdwg.mxu0
    %v328 = vadd.f32 %v232, %v314
    %v329 = vadd.f32 %v235, %v317
    %v330 = vadd.f32 %v240, %v322
    %v331 = vadd.f32 %v243, %v325
    %v332 = vrot.slane %v40, 3
    %v333 = vrot.slane %v41, 3
    %v334 = vrot.slane %v72, 3
    %v335 = vrot.slane %v73, 3
    %vm336 = vcmp.lt.s32.totalorder %v99, 5
    %v337 = vsel %vm336, %v334, %v335
    %v338 = vsel %vm336, %v333, %v334
    %v339 = vsel %vm336, %v332, %v333
    %v340 = vsel %vm336, %v335, %v332
    %v341 = vpack.c.bf16 %v338, %v339
    %v342 = vpack.c.bf16 %v340, %v337
    %v343 = vld [vmem:[%s1 + $0x30] sm:$0xf]
    %v344 = vld [vmem:[%s1 + $0x34] sm:$0xf]
    %v345 = vld [vmem:[%s1 + $0x38] sm:$0xf]
    %v346 = vld [vmem:[%s1 + $0x3c] sm:$0xf]
    %v351 = vunpack.c.l.b16 %v343
    %v352 = vunpack.c.l.b16 %v344
    %v353 = vunpack.c.l.b16 %v345
    %v354 = vunpack.c.l.b16 %v346
    %v355 = vpack.c.b16 %v352, %v351
    %v356 = vpack.c.b16 %v354, %v353
    %v360 = vsel %vm123, %v341, 0
    %v363 = vsel %vm123, %v342, 0
    %365 = vmatprep.subr.bf16.mxu0 0
    %366 = vmatpush1.bf16.msra.mxu0 %v355
    %367 = vmatprep.subr.bf16.mxu0 0
    %368 = vmatpush1.bf16.msra.mxu0 %v356
    %369 = vmatprep.subr.bf16.mxu0 0
    %370 = vmatpush1.bf16.msra.mxu0 0
    %371 = vmatprep.subr.bf16.mxu0 0
    %372 = vmatpush1.bf16.msra.mxu0 0
    %373 = vmatprep.subr.bf16.mxu0 0
    %374 = vmatpush1.bf16.msra.mxu0 0
    %375 = vmatprep.subr.bf16.mxu0 0
    %376 = vmatpush1.bf16.msra.mxu0 0
    %377 = vmatprep.subr.bf16.mxu0 0
    %378 = vmatpush1.bf16.msra.mxu0 0
    %379 = vmatprep.subr.bf16.mxu0 0
    %380 = vmatpush1.bf16.msra.mxu0 0
    %381 = vmatprep.subr.bf16.mxu0 0
    %382 = vmatpush1.bf16.msra.mxu0 0
    %383 = vmatprep.subr.bf16.mxu0 0
    %384 = vmatpush1.bf16.msra.mxu0 0
    %385 = vmatprep.subr.bf16.mxu0 0
    %386 = vmatpush1.bf16.msra.mxu0 0
    %387 = vmatprep.subr.bf16.mxu0 0
    %388 = vmatpush1.bf16.msra.mxu0 0
    %389 = vmatprep.subr.bf16.mxu0 0
    %390 = vmatpush1.bf16.msra.mxu0 0
    %391 = vmatprep.subr.bf16.mxu0 0
    %392 = vmatpush1.bf16.msra.mxu0 0
    %393 = vmatprep.subr.bf16.mxu0 0
    %394 = vmatpush1.bf16.msra.mxu0 0
    %395 = vmatprep.subr.bf16.mxu0 0
    %396 = vmatpush1.bf16.msra.mxu0 0
    %397 = vmatprep.mubr.bf16.mxu0 0
    %398 = vmatmul.mubr.bf16.gmra.mrb[0].mxu0 %v360
    %v399 = vpop.f32.mrb[0].mxu0
    %v400 = vadd.f32 0.0, %v399
    %v401 = vpop.f32.mrb[0].mxu0
    %v402 = vpop.f32.mrb[0].mxu0
    %v403 = vadd.f32 0.0, %v402
    %v404 = vpop.f32.mrb[0].mxu0
    %405 = vmatprep.mubr.bf16.mxu0 0
    %406 = vmatmul.mubr.bf16.gmra.mrb[0].mxu0 %v363
    %v407 = vpop.f32.mrb[0].mxu0
    %v408 = vadd.f32 0.0, %v407
    %v409 = vpop.f32.mrb[0].mxu0
    %v410 = vpop.f32.mrb[0].mxu0
    %v411 = vadd.f32 0.0, %v410
    %v412 = vpop.f32.mrb[0].mxu0
    %413 = vdwg.mxu0
    %v414 = vadd.f32 %v328, %v400
    %v415 = vadd.f32 %v329, %v403
    %v416 = vadd.f32 %v330, %v408
    %v417 = vadd.f32 %v331, %v411
    %v418 = vrot.slane %v40, 4
    %v419 = vrot.slane %v41, 4
    %v420 = vrot.slane %v72, 4
    %v421 = vrot.slane %v73, 4
    %vm422 = vcmp.lt.s32.totalorder %v99, 4
    %v423 = vsel %vm422, %v420, %v421
    %v424 = vsel %vm422, %v419, %v420
    %v425 = vsel %vm422, %v418, %v419
    %v426 = vsel %vm422, %v421, %v418
    %v427 = vpack.c.bf16 %v424, %v425
    %v428 = vpack.c.bf16 %v426, %v423
    %v429 = vld [vmem:[%s1 + $0x40] sm:$0xf]
    %v430 = vld [vmem:[%s1 + $0x44] sm:$0xf]
    %v431 = vld [vmem:[%s1 + $0x48] sm:$0xf]
    %v432 = vld [vmem:[%s1 + $0x4c] sm:$0xf]
    %v437 = vunpack.c.l.b16 %v429
    %v438 = vunpack.c.l.b16 %v430
    %v439 = vunpack.c.l.b16 %v431
    %v440 = vunpack.c.l.b16 %v432
    %v441 = vpack.c.b16 %v438, %v437
    %v442 = vpack.c.b16 %v440, %v439
    %v446 = vsel %vm123, %v427, 0
    %v449 = vsel %vm123, %v428, 0
    %451 = vmatprep.subr.bf16.mxu0 0
    %452 = vmatpush1.bf16.msra.mxu0 %v441
    %453 = vmatprep.subr.bf16.mxu0 0
    %454 = vmatpush1.bf16.msra.mxu0 %v442
    %455 = vmatprep.subr.bf16.mxu0 0
    %456 = vmatpush1.bf16.msra.mxu0 0
    %457 = vmatprep.subr.bf16.mxu0 0
    %458 = vmatpush1.bf16.msra.mxu0 0
    %459 = vmatprep.subr.bf16.mxu0 0
    %460 = vmatpush1.bf16.msra.mxu0 0
    %461 = vmatprep.subr.bf16.mxu0 0
    %462 = vmatpush1.bf16.msra.mxu0 0
    %463 = vmatprep.subr.bf16.mxu0 0
    %464 = vmatpush1.bf16.msra.mxu0 0
    %465 = vmatprep.subr.bf16.mxu0 0
    %466 = vmatpush1.bf16.msra.mxu0 0
    %467 = vmatprep.subr.bf16.mxu0 0
    %468 = vmatpush1.bf16.msra.mxu0 0
    %469 = vmatprep.subr.bf16.mxu0 0
    %470 = vmatpush1.bf16.msra.mxu0 0
    %471 = vmatprep.subr.bf16.mxu0 0
    %472 = vmatpush1.bf16.msra.mxu0 0
    %473 = vmatprep.subr.bf16.mxu0 0
    %474 = vmatpush1.bf16.msra.mxu0 0
    %475 = vmatprep.subr.bf16.mxu0 0
    %476 = vmatpush1.bf16.msra.mxu0 0
    %477 = vmatprep.subr.bf16.mxu0 0
    %478 = vmatpush1.bf16.msra.mxu0 0
    %479 = vmatprep.subr.bf16.mxu0 0
    %480 = vmatpush1.bf16.msra.mxu0 0
    %481 = vmatprep.subr.bf16.mxu0 0
    %482 = vmatpush1.bf16.msra.mxu0 0
    %483 = vmatprep.mubr.bf16.mxu0 0
    %484 = vmatmul.mubr.bf16.gmra.mrb[0].mxu0 %v446
    %v485 = vpop.f32.mrb[0].mxu0
    %v486 = vadd.f32 0.0, %v485
    %v487 = vpop.f32.mrb[0].mxu0
    %v488 = vpop.f32.mrb[0].mxu0
    %v489 = vadd.f32 0.0, %v488
    %v490 = vpop.f32.mrb[0].mxu0
    %491 = vmatprep.mubr.bf16.mxu0 0
    %492 = vmatmul.mubr.bf16.gmra.mrb[0].mxu0 %v449
    %v493 = vpop.f32.mrb[0].mxu0
    %v494 = vadd.f32 0.0, %v493
    %v495 = vpop.f32.mrb[0].mxu0
    %v496 = vpop.f32.mrb[0].mxu0
    %v497 = vadd.f32 0.0, %v496
    %v498 = vpop.f32.mrb[0].mxu0
    %499 = vdwg.mxu0
    %v500 = vadd.f32 %v414, %v486
    %v501 = vadd.f32 %v415, %v489
    %v502 = vadd.f32 %v416, %v494
    %v503 = vadd.f32 %v417, %v497
    %v504 = vld [vmem:[%s2] sm:$0x1]
    %v506 = vlaneseq
    %v507 = vshrl.u32 %v506, 7
    %v508 = vsub.s32 0, %v507
    %v509 = vrot.slane %v504, %v508
    %v511 = vadd.f32 %v500, %v509
    %v512 = vadd.f32 %v501, %v509
    %v513 = vadd.f32 %v502, %v509
    %v514 = vadd.f32 %v503, %v509
    %v515 = vmax.f32 %v511, 0.0
    %v516 = vmax.f32 %v512, 0.0
    %v517 = vmax.f32 %v513, 0.0
    %v518 = vmax.f32 %v514, 0.0
    %v519 = vadd.s32 %v99, 8
    %vm520 = vcmp.lt.s32.totalorder %v99, 12
    %vm521 = vcmp.lt.s32.totalorder %v519, 12
    %v522 = vsel %vm520, 1, 0
    %v523 = vsel %vm521, 1, 0
    %vm524 = vcmp.eq.s32.totalorder %v522, 1
    %vm525 = vcmp.eq.s32.totalorder %v523, 1
    %v526 = vsel %vm524, %v515, 0.0
    %v527 = vsel %vm525, %v516, 0.0
    %v528 = vsel %vm524, %v517, 0.0
    %v529 = vsel %vm525, %v518, 0.0
    %v530 = vmax.f32 %v526, %v527
    %v531 = vrot.slane %v530, 4
    %v532 = vmax.f32 %v530, %v531
    %v533 = vrot.slane %v532, 2
    %v534 = vmax.f32 %v532, %v533
    %v535 = vrot.slane %v534, 1
    %v536 = vmax.f32 %v534, %v535
    %v537 = vmax.f32 %v528, %v529
    %v538 = vrot.slane %v537, 4
    %v539 = vmax.f32 %v537, %v538
    %v540 = vrot.slane %v539, 2
    %v541 = vmax.f32 %v539, %v540
    %v542 = vrot.slane %v541, 1
    %v543 = vmax.f32 %v541, %v542
    %vm546 = vcmask 1041409
    %v547 = vsel %vm546, %v543, %v536
    %549 = vst [vmem:[#allocation2] sm:$0x3] %v547
    // Predicated region
    $region14: #{tpu_custom_call.1} parent=1 // pred_check
      _
    $region15: #{tpu_custom_call.1} parent=1 // pred_check_branch
      %551 = sbr.rel (0) target = $region17
    $region16: #{tpu_custom_call.1} parent=1 // pred_region
      %s553 = ssub.s32 32, 32
      %554 = vsyncadd [#allocation3], %s553
      %s556 = sshll.u32 [#allocation2], 4
      %s557 = int_to_ptr.vmem [resolvable:$true] %s556
      %559 = dma.vmem_to_hbm [thread:$0]  %s557, 32, %s3, [#allocation3]
    $region17: #{tpu_custom_call.1} parent=1 // pred_fallthru
      _
    // Predicated region
    $region18: #{tpu_custom_call.1} parent=1 // pred_check
      _
    $region19: #{tpu_custom_call.1} parent=1 // pred_check_branch
      %561 = sbr.rel (0) target = $region21
    $region20: #{tpu_custom_call.1} parent=1 // pred_region
      %562 = dma.done [#allocation3], 32
    $region21: #{tpu_custom_call.1} parent=1 // pred_fallthru
      _
    %563 = vsyncpa [#allocation3], 1

</llo_original>
